<compile_context>
chip_gen: v6e
topology: v6e:2x2x1
jax: 0.10.0
libtpu: 0.0.40
codegen_flags: <defaults>
</compile_context>

<pallas_src>
import functools

import jax
import jax.numpy as jnp
import numpy as np
from jax.experimental import pallas as pl
from jax.experimental.pallas import tpu as pltpu


# ---------------------------------------------------------------------------
# LocalizingMask: runs once, off the hot path -> plain XLA (no Pallas launch).
# ---------------------------------------------------------------------------
def localizing_mask(L, kernel_size, threshold):
    n = L.shape[0]
    A = jnp.abs(L) + jnp.eye(n, dtype=L.dtype)
    P = A
    for _ in range(kernel_size - 1):
        P = P @ A
    return (P > threshold).astype(jnp.float32)


# ---------------------------------------------------------------------------
# AnisoConv main kernel: one grid step per block of `block_m` rotations.
# ---------------------------------------------------------------------------
def _aniso_kernel(r_ref, v_ref, d_ref, mf_ref, o_ref, *, compute_dtype):
    block_m, n = o_ref.shape

    # (1) One MXU matmul for the whole rotation block:
    #     RV = [R_0; R_1; ...] @ V   -> (block_m*n, n), f32 accumulation.
    rv = jnp.dot(r_ref[...], v_ref[...], preferred_element_type=jnp.float32)

    # Column scaling by d = lam * coefficients (grid-invariant, hoisted to wrapper).
    rvd = rv * d_ref[...]

    rv3 = rv.astype(compute_dtype).reshape(block_m, n, n)
    rvd3 = rvd.astype(compute_dtype).reshape(block_m, n, n)

    # (2) Ft[b, k, i] = sum_j RV[b, k, j] * RVd[b, i, j]  (== F[b, i, k] of the reference).
    #     Contraction over the last dims of both operands -> no RV.T materialized.
    ft = jnp.einsum("bkj,bij->bki", rv3, rvd3, preferred_element_type=jnp.float32)

    # (3) Lane-dense masked matvec via a sublane reduction:
    #     out[b, i] = sum_k F[b, i, k] * mask[i, k] * f[k]
    #               = sum_k Ft[b, k, i] * mf[k, i],   mf[k, i] = mask[i, k] * f[k].
    o_ref[...] = jnp.sum(ft * mf_ref[...][None, :, :], axis=1).astype(o_ref.dtype)


def _pick_block_m(m, n, max_rows=1024):
    """Largest divisor of m whose stacked rotation block has <= max_rows MXU rows."""
    best = 1
    for bm in range(1, m + 1):
        if m % bm == 0 and bm * n <= max_rows:
            best = bm
    return best


def aniso_conv(L, V, lam, f, R, coefficients, kernel_size, threshold,
               *, compute_dtype=jnp.bfloat16, block_m=None):
    """Pallas implementation of AnisoConv.forward. Returns (m, n) float32."""
    m, n, _ = R.shape

    # Grid-invariant precompute (plain XLA, runs once).
    mask = localizing_mask(L, kernel_size, threshold)                  # (n, n)
    d_row = (lam * coefficients).reshape(1, n).astype(jnp.float32)     # (1, n)
    mf = (mask.T * f.reshape(n, 1)).astype(jnp.float32)                # mf[k, i] = mask[i, k] * f[k]

    # Stack rotations so each grid step is one big MXU matmul; cast matmul operands.
    R2 = R.reshape(m * n, n).astype(compute_dtype)                     # (m*n, n)
    Vc = V.astype(compute_dtype)                                       # (n, n)

    if block_m is None:
        block_m = _pick_block_m(m, n)
    assert m % block_m == 0
    grid = (m // block_m,)

    kernel = functools.partial(_aniso_kernel, compute_dtype=compute_dtype)

    out = pl.pallas_call(
        kernel,
        out_shape=jax.ShapeDtypeStruct((m, n), jnp.float32),
        grid=grid,
        in_specs=[
            pl.BlockSpec((block_m * n, n), lambda i: (i, 0)),   # stacked R block
            pl.BlockSpec((n, n), lambda i: (0, 0)),             # V (grid-invariant)
            pl.BlockSpec((1, n), lambda i: (0, 0)),             # d = lam*coeff
            pl.BlockSpec((n, n), lambda i: (0, 0)),             # mf = mask^T * f
        ],
        out_specs=pl.BlockSpec((block_m, n), lambda i: (i, 0)),
        compiler_params=pltpu.CompilerParams(
            dimension_semantics=("parallel",),                  # rotations independent (megacore)
            vmem_limit_bytes=32 * 1024 * 1024,
        ),
    )(R2, Vc, d_row, mf)

    return out


# ---------------------------------------------------------------------------
# Pure-JAX reference (mirrors the PyTorch forward exactly)
# ---------------------------------------------------------------------------
def aniso_conv_ref(L, V, lam, f, R, coefficients, kernel_size, threshold):
    RV = jnp.matmul(R, V)                                              # (m, n, n)
    D = jnp.diag(lam * coefficients)                                   # (n, n)
    F = jnp.matmul(jnp.matmul(RV, D), jnp.transpose(RV, (0, 2, 1)))    # (m, n, n)
    mask = localizing_mask(L, kernel_size, threshold)                  # (n, n)
    F_loc = F * mask
    return jnp.matmul(F_loc, f)                                        # (m, n)


if __name__ == "__main__":
    n = 32            # graph size (number of nodes / eigenvectors)
    m = 4             # number of rotations
    kernel_size = 2   # k-hop localization
    threshold = 0.1

    key = jax.random.PRNGKey(0)
    k_adj, k_rot, k_f, k_coef = jax.random.split(key, 4)

    # Symmetric graph Laplacian L = D - A for a random weighted graph.
    W = jax.random.uniform(k_adj, (n, n), dtype=jnp.float32)
    W = (W + W.T) * 0.5
    W = W * (W > 0.6)
    W = W - jnp.diag(jnp.diag(W))
    L = jnp.diag(jnp.sum(W, axis=1)) - W                               # (n, n)

    # Eigendecomposition (glue, not the hot path).
    lam, V = jnp.linalg.eigh(L)
    lam = lam.astype(jnp.float32)
    V = V.astype(jnp.float32)

    # m random orthogonal eigenspace rotations via QR.
    G = jax.random.normal(k_rot, (m, n, n), dtype=jnp.float32)
    Q, _ = jnp.linalg.qr(G)
    R = Q.astype(jnp.float32)                                          # (m, n, n)

    # Signal and learned coefficients.
    f = jax.random.normal(k_f, (n,), dtype=jnp.float32)
    coefficients = jax.random.normal(k_coef, (n,), dtype=jnp.float32)

    ref = np.asarray(aniso_conv_ref(L, V, lam, f, R, coefficients, kernel_size, threshold))

    # f32 path: tight check against the reference.
    out_f32 = aniso_conv(L, V, lam, f, R, coefficients, kernel_size, threshold,
                         compute_dtype=jnp.float32)
    out_f32 = jax.block_until_ready(out_f32)
    np.testing.assert_allclose(np.asarray(out_f32), ref, rtol=5e-4, atol=5e-4)

    # bf16-operand path (f32 accumulation): relaxed relative-error check.
    out_bf16 = aniso_conv(L, V, lam, f, R, coefficients, kernel_size, threshold,
                          compute_dtype=jnp.bfloat16)
    out_bf16 = jax.block_until_ready(out_bf16)
    rel = np.linalg.norm(np.asarray(out_bf16) - ref) / np.linalg.norm(ref)
    assert rel < 5e-2, f"bf16 relative error too large: {rel}"

    print("KERNEL_OK")
</pallas_src>

<mosaic_0001>
module attributes {stable_mosaic.version = 11 : i64} {
  func.func @_aniso_kernel(%arg0: i32, %arg1: memref<128x32xf32, #tpu.memory_space<vmem>>, %arg2: memref<32x32xf32, #tpu.memory_space<vmem>>, %arg3: memref<1x32xf32, #tpu.memory_space<vmem>>, %arg4: memref<32x32xf32, #tpu.memory_space<vmem>>, %arg5: memref<4x32xf32, #tpu.memory_space<vmem>>) attributes {dimension_semantics = [#tpu.dimension_semantics<parallel>], iteration_bounds = array<i64: 1>, scalar_prefetch = 0 : i64, scratch_operands = 0 : i64, tpu.core_type = #tpu.core_type<tc>, window_params = [{transform_indices = @transform_0, window_bounds = array<i64: 128, 32>}, {pipeline_mode = #tpu.pipeline_mode<synchronous>, transform_indices = @transform_1, window_bounds = array<i64: 32, 32>}, {pipeline_mode = #tpu.pipeline_mode<synchronous>, transform_indices = @transform_2, window_bounds = array<i64: 1, 32>}, {pipeline_mode = #tpu.pipeline_mode<synchronous>, transform_indices = @transform_3, window_bounds = array<i64: 32, 32>}, {transform_indices = @transform_4, window_bounds = array<i64: 4, 32>}]} {
    %c0 = arith.constant 0 : index
    %c0_0 = arith.constant 0 : index
    %0 = vector.load %arg1[%c0, %c0_0] : memref<128x32xf32, #tpu.memory_space<vmem>>, vector<128x32xf32>
    %c0_1 = arith.constant 0 : index
    %c0_2 = arith.constant 0 : index
    %1 = vector.load %arg2[%c0_1, %c0_2] : memref<32x32xf32, #tpu.memory_space<vmem>>, vector<32x32xf32>
    %cst = arith.constant dense<0.000000e+00> : vector<128x32xf32>
    %2 = tpu.matmul %0, %1, %cst {dimension_numbers = #tpu.dot_dimension_numbers<[1], [0], [0], [1], [0, 0, 1, 1], [], []>} : vector<128x32xf32>, vector<32x32xf32>, vector<128x32xf32> -> vector<128x32xf32>
    %c0_3 = arith.constant 0 : index
    %c0_4 = arith.constant 0 : index
    %3 = vector.load %arg3[%c0_3, %c0_4] : memref<1x32xf32, #tpu.memory_space<vmem>>, vector<1x32xf32>
    %4 = vector.broadcast %3 : vector<1x32xf32> to vector<128x32xf32>
    %5 = arith.mulf %2, %4 : vector<128x32xf32>
    %6 = vector.shape_cast %2 : vector<128x32xf32> to vector<4x32x32xf32>
    %7 = vector.shape_cast %5 : vector<128x32xf32> to vector<4x32x32xf32>
    "tpu.trace_start"() <{level = 10 : i32, message = "bkj,bij->bki"}> : () -> ()
    %cst_5 = arith.constant dense<0.000000e+00> : vector<4x32x32xf32>
    %8 = tpu.matmul %6, %7, %cst_5 {dimension_numbers = #tpu.dot_dimension_numbers<[2], [2], [1], [1], [0, 0, 0, 1, 1, 1], [0], [0]>} : vector<4x32x32xf32>, vector<4x32x32xf32>, vector<4x32x32xf32> -> vector<4x32x32xf32>
    "tpu.trace_stop"() : () -> ()
    %c0_6 = arith.constant 0 : index
    %c0_7 = arith.constant 0 : index
    %9 = vector.load %arg4[%c0_6, %c0_7] : memref<32x32xf32, #tpu.memory_space<vmem>>, vector<32x32xf32>
    %10 = vector.shape_cast %9 : vector<32x32xf32> to vector<1x32x32xf32>
    %11 = vector.broadcast %10 : vector<1x32x32xf32> to vector<4x32x32xf32>
    %12 = arith.mulf %8, %11 : vector<4x32x32xf32>
    %cst_8 = arith.constant dense<0.000000e+00> : vector<4x32xf32>
    %13 = vector.multi_reduction <add>, %12, %cst_8 [1] : vector<4x32x32xf32> to vector<4x32xf32>
    %c0_9 = arith.constant 0 : index
    %c0_10 = arith.constant 0 : index
    %14 = vector.load %arg5[%c0_9, %c0_10] : memref<4x32xf32, #tpu.memory_space<vmem>>, vector<4x32xf32>
    tpu.vector_store %arg5[%c0_9, %c0_10], %13 {strides = array<i32>} : memref<4x32xf32, #tpu.memory_space<vmem>>, vector<4x32xf32>,
    return
  }
  func.func @transform_0(%arg0: i32) -> (i32, i32) {
    %c0_i32 = arith.constant 0 : i32
    %c0_i32_0 = arith.constant 0 : i32
    return %arg0, %c0_i32 : i32, i32
  }
  func.func @transform_1(%arg0: i32) -> (i32, i32) {
    %c0_i32 = arith.constant 0 : i32
    %c0_i32_0 = arith.constant 0 : i32
    %c0_i32_1 = arith.constant 0 : i32
    return %c0_i32, %c0_i32_0 : i32, i32
  }
  func.func @transform_2(%arg0: i32) -> (i32, i32) {
    %c0_i32 = arith.constant 0 : i32
    %c0_i32_0 = arith.constant 0 : i32
    %c0_i32_1 = arith.constant 0 : i32
    return %c0_i32, %c0_i32_0 : i32, i32
  }
  func.func @transform_3(%arg0: i32) -> (i32, i32) {
    %c0_i32 = arith.constant 0 : i32
    %c0_i32_0 = arith.constant 0 : i32
    %c0_i32_1 = arith.constant 0 : i32
    return %c0_i32, %c0_i32_0 : i32, i32
  }
  func.func @transform_4(%arg0: i32) -> (i32, i32) {
    %c0_i32 = arith.constant 0 : i32
    %c0_i32_0 = arith.constant 0 : i32
    return %arg0, %c0_i32 : i32, i32
  }
}

</mosaic_0001>

<llo_original>
// kernel: tpu_custom_call.1
$region0: #{tpu_custom_call.1}
  #allocation0 [shape = 'u32[]', space=smem, size = 0x4, offset = 0x4, fixed_abs, tag = 'smem constant byte address 0x4 - core index']
  #allocation1 [shape = 'u32[144,128]{1,0:T(1,128)}', space=vmem, size = 0x12000, scoped, tag = 'internal scratch']
  %s0 = inlined_call_operand.vmem [shape: f32[128,32], index: 0, kind: input, shape index: {}]
  %s1 = inlined_call_operand.vmem [shape: f32[32,32], index: 1, kind: input, shape index: {}]
  %s2 = inlined_call_operand.vmem [shape: f32[1,32], index: 2, kind: input, shape index: {}]
  %s3 = inlined_call_operand.vmem [shape: f32[32,32], index: 3, kind: input, shape index: {}]
  %s4 = inlined_call_operand.hbm [shape: f32[4,32], index: 4, kind: output, shape index: {}]
  %s5 = sld [smem:[#allocation0]]
  $region26: #{tpu_custom_call.1} parent=0
    _
  %s7 = ssub.s32 1, %s5
  %s8 = scalar_select 0, %s7, %s5
  $region1: #{tpu_custom_call.1} parent=0
    #allocation2 [shape = 'u8[2048]{0}', space=vmem, size = 0x800, scoped, tag = 'output window, operand 0, single buffered']
    #allocation3 [shape = 's32[1]{0}', space=sflag, size = 0x4, scoped, tag = 'scoped memory for tpu_custom_call.1']
    %9 = vsyncpa [#allocation3], 0
    // Predicated region
    $region2: #{tpu_custom_call.1} parent=1 // pred_check
      _
    $region3: #{tpu_custom_call.1} parent=1 // pred_check_branch
      %11 = sbr.rel (0) target = $region5
    $region4: #{tpu_custom_call.1} parent=1 // pred_region
      _
    $region5: #{tpu_custom_call.1} parent=1 // pred_fallthru
      _
    // Predicated region
    $region6: #{tpu_custom_call.1} parent=1 // pred_check
      _
    $region7: #{tpu_custom_call.1} parent=1 // pred_check_branch
      %13 = sbr.rel (0) target = $region9
    $region8: #{tpu_custom_call.1} parent=1 // pred_region
      _
    $region9: #{tpu_custom_call.1} parent=1 // pred_fallthru
      _
    // Predicated region
    $region10: #{tpu_custom_call.1} parent=1 // pred_check
      _
    $region11: #{tpu_custom_call.1} parent=1 // pred_check_branch
      %15 = sbr.rel (0) target = $region13
    $region12: #{tpu_custom_call.1} parent=1 // pred_region
      _
    $region13: #{tpu_custom_call.1} parent=1 // pred_fallthru
      _
    // Predicated region
    $region14: #{tpu_custom_call.1} parent=1 // pred_check
      _
    $region15: #{tpu_custom_call.1} parent=1 // pred_check_branch
      %17 = sbr.rel (0) target = $region17
    $region16: #{tpu_custom_call.1} parent=1 // pred_region
      _
    $region17: #{tpu_custom_call.1} parent=1 // pred_fallthru
      _
    %v18 = vld [vmem:[%s0] sm:$0xff]
    %v19 = vld [vmem:[%s0 + $0x8] sm:$0xff]
    %v20 = vld [vmem:[%s0 + $0x10] sm:$0xff]
    %v21 = vld [vmem:[%s0 + $0x18] sm:$0xff]
    %v22 = vld [vmem:[%s0 + $0x20] sm:$0xff]
    %v23 = vld [vmem:[%s0 + $0x28] sm:$0xff]
    %v24 = vld [vmem:[%s0 + $0x30] sm:$0xff]
    %v25 = vld [vmem:[%s0 + $0x38] sm:$0xff]
    %v26 = vld [vmem:[%s0 + $0x40] sm:$0xff]
    %v27 = vld [vmem:[%s0 + $0x48] sm:$0xff]
    %v28 = vld [vmem:[%s0 + $0x50] sm:$0xff]
    %v29 = vld [vmem:[%s0 + $0x58] sm:$0xff]
    %v30 = vld [vmem:[%s0 + $0x60] sm:$0xff]
    %v31 = vld [vmem:[%s0 + $0x68] sm:$0xff]
    %v32 = vld [vmem:[%s0 + $0x70] sm:$0xff]
    %v33 = vld [vmem:[%s0 + $0x78] sm:$0xff]
    %v34 = vld [vmem:[%s1] sm:$0xff]
    %v35 = vld [vmem:[%s1 + $0x8] sm:$0xff]
    %v36 = vld [vmem:[%s1 + $0x10] sm:$0xff]
    %v37 = vld [vmem:[%s1 + $0x18] sm:$0xff]
    %vm38 = vcmask 261120
    %v40 = vsel %vm38, %v18, 0
    %v43 = vsel %vm38, %v19, 0
    %v46 = vsel %vm38, %v20, 0
    %v49 = vsel %vm38, %v21, 0
    %v52 = vsel %vm38, %v22, 0
    %v55 = vsel %vm38, %v23, 0
    %v58 = vsel %vm38, %v24, 0
    %v61 = vsel %vm38, %v25, 0
    %v64 = vsel %vm38, %v26, 0
    %v67 = vsel %vm38, %v27, 0
    %v70 = vsel %vm38, %v28, 0
    %v73 = vsel %vm38, %v29, 0
    %v76 = vsel %vm38, %v30, 0
    %v79 = vsel %vm38, %v31, 0
    %v82 = vsel %vm38, %v32, 0
    %v85 = vsel %vm38, %v33, 0
    %87 = vmatprep.subr.mxu0 0.0
    %88 = vmatpush1.msra.mxu0 0.0
    %89 = vmatprep.subr.mxu0 0.0
    %90 = vmatpush1.msra.mxu0 0.0
    %91 = vmatprep.subr.mxu0 0.0
    %92 = vmatpush1.msra.mxu0 0.0
    %93 = vmatprep.subr.mxu0 0.0
    %94 = vmatpush1.msra.mxu0 0.0
    %95 = vmatprep.subr.mxu0 0.0
    %96 = vmatpush1.msra.mxu0 0.0
    %97 = vmatprep.subr.mxu0 0.0
    %98 = vmatpush1.msra.mxu0 0.0
    %99 = vmatprep.subr.mxu0 0.0
    %100 = vmatpush1.msra.mxu0 0.0
    %101 = vmatprep.subr.mxu0 0.0
    %102 = vmatpush1.msra.mxu0 0.0
    %103 = vmatprep.subr.mxu0 0.0
    %104 = vmatpush1.msra.mxu0 0.0
    %105 = vmatprep.subr.mxu0 0.0
    %106 = vmatpush1.msra.mxu0 0.0
    %107 = vmatprep.subr.mxu0 0.0
    %108 = vmatpush1.msra.mxu0 0.0
    %109 = vmatprep.subr.mxu0 0.0
    %110 = vmatpush1.msra.mxu0 0.0
    %111 = vmatprep.subr.mxu0 0.0
    %112 = vmatpush1.msra.mxu0 %v37
    %113 = vmatprep.subr.mxu0 0.0
    %114 = vmatpush1.msra.mxu0 %v36
    %115 = vmatprep.subr.mxu0 0.0
    %116 = vmatpush1.msra.mxu0 %v35
    %117 = vmatprep.subr.mxu0 0.0
    %118 = vmatpush1.msra.mxu0 %v34
    %119 = vmatprep.subr.mxu0 0.0
    %120 = vmatpush2.msra.mxu0 0.0
    %121 = vmatprep.subr.mxu0 0.0
    %122 = vmatpush2.msra.mxu0 0.0
    %123 = vmatprep.subr.mxu0 0.0
    %124 = vmatpush2.msra.mxu0 0.0
    %125 = vmatprep.subr.mxu0 0.0
    %126 = vmatpush2.msra.mxu0 0.0
    %127 = vmatprep.subr.mxu0 0.0
    %128 = vmatpush2.msra.mxu0 0.0
    %129 = vmatprep.subr.mxu0 0.0
    %130 = vmatpush2.msra.mxu0 0.0
    %131 = vmatprep.subr.mxu0 0.0
    %132 = vmatpush2.msra.mxu0 0.0
    %133 = vmatprep.subr.mxu0 0.0
    %134 = vmatpush2.msra.mxu0 0.0
    %135 = vmatprep.subr.mxu0 0.0
    %136 = vmatpush2.msra.mxu0 0.0
    %137 = vmatprep.subr.mxu0 0.0
    %138 = vmatpush2.msra.mxu0 0.0
    %139 = vmatprep.subr.mxu0 0.0
    %140 = vmatpush2.msra.mxu0 0.0
    %141 = vmatprep.subr.mxu0 0.0
    %142 = vmatpush2.msra.mxu0 0.0
    %143 = vmatprep.subr.mxu0 0.0
    %144 = vmatpush2.msra.mxu0 0.0
    %145 = vmatprep.subr.mxu0 0.0
    %146 = vmatpush2.msra.mxu0 0.0
    %147 = vmatprep.subr.mxu0 0.0
    %148 = vmatpush2.msra.mxu0 0.0
    %149 = vmatprep.subr.mxu0 0.0
    %150 = vmatpush2.msra.mxu0 0.0
    %151 = vmatprep.mubr.f32.mxu0 0.0
    %152 = vmatmul.mubr.f32.gmra.mxu0 %v40
    %v153 = vpop.f32.mrf.mxu0
    %v154 = vadd.f32 0.0, %v153
    %v155 = vpop.f32.mrf.mxu0
    %156 = vmatprep.mubr.f32.mxu0 0.0
    %157 = vmatmul.mubr.f32.gmra.mxu0 %v43
    %v158 = vpop.f32.mrf.mxu0
    %v159 = vadd.f32 0.0, %v158
    %v160 = vpop.f32.mrf.mxu0
    %161 = vmatprep.mubr.f32.mxu0 0.0
    %162 = vmatmul.mubr.f32.gmra.mxu0 %v46
    %v163 = vpop.f32.mrf.mxu0
    %v164 = vadd.f32 0.0, %v163
    %v165 = vpop.f32.mrf.mxu0
    %166 = vmatprep.mubr.f32.mxu0 0.0
    %167 = vmatmul.mubr.f32.gmra.mxu0 %v49
    %v168 = vpop.f32.mrf.mxu0
    %v169 = vadd.f32 0.0, %v168
    %v170 = vpop.f32.mrf.mxu0
    %171 = vmatprep.mubr.f32.mxu0 0.0
    %172 = vmatmul.mubr.f32.gmra.mxu0 %v52
    %v173 = vpop.f32.mrf.mxu0
    %v174 = vadd.f32 0.0, %v173
    %v175 = vpop.f32.mrf.mxu0
    %176 = vmatprep.mubr.f32.mxu0 0.0
    %177 = vmatmul.mubr.f32.gmra.mxu0 %v55
    %v178 = vpop.f32.mrf.mxu0
    %v179 = vadd.f32 0.0, %v178
    %v180 = vpop.f32.mrf.mxu0
    %181 = vmatprep.mubr.f32.mxu0 0.0
    %182 = vmatmul.mubr.f32.gmra.mxu0 %v58
    %v183 = vpop.f32.mrf.mxu0
    %v184 = vadd.f32 0.0, %v183
    %v185 = vpop.f32.mrf.mxu0
    %186 = vmatprep.mubr.f32.mxu0 0.0
    %187 = vmatmul.mubr.f32.gmra.mxu0 %v61
    %v188 = vpop.f32.mrf.mxu0
    %v189 = vadd.f32 0.0, %v188
    %v190 = vpop.f32.mrf.mxu0
    %191 = vmatprep.mubr.f32.mxu0 0.0
    %192 = vmatmul.mubr.f32.gmra.mxu0 %v64
    %v193 = vpop.f32.mrf.mxu0
    %v194 = vadd.f32 0.0, %v193
    %v195 = vpop.f32.mrf.mxu0
    %196 = vmatprep.mubr.f32.mxu0 0.0
    %197 = vmatmul.mubr.f32.gmra.mxu0 %v67
    %v198 = vpop.f32.mrf.mxu0
    %v199 = vadd.f32 0.0, %v198
    %v200 = vpop.f32.mrf.mxu0
    %201 = vmatprep.mubr.f32.mxu0 0.0
    %202 = vmatmul.mubr.f32.gmra.mxu0 %v70
    %v203 = vpop.f32.mrf.mxu0
    %v204 = vadd.f32 0.0, %v203
    %v205 = vpop.f32.mrf.mxu0
    %206 = vmatprep.mubr.f32.mxu0 0.0
    %207 = vmatmul.mubr.f32.gmra.mxu0 %v73
    %v208 = vpop.f32.mrf.mxu0
    %v209 = vadd.f32 0.0, %v208
    %v210 = vpop.f32.mrf.mxu0
    %211 = vmatprep.mubr.f32.mxu0 0.0
    %212 = vmatmul.mubr.f32.gmra.mxu0 %v76
    %v213 = vpop.f32.mrf.mxu0
    %v214 = vadd.f32 0.0, %v213
    %v215 = vpop.f32.mrf.mxu0
    %216 = vmatprep.mubr.f32.mxu0 0.0
    %217 = vmatmul.mubr.f32.gmra.mxu0 %v79
    %v218 = vpop.f32.mrf.mxu0
    %v219 = vadd.f32 0.0, %v218
    %v220 = vpop.f32.mrf.mxu0
    %221 = vmatprep.mubr.f32.mxu0 0.0
    %222 = vmatmul.mubr.f32.gmra.mxu0 %v82
    %v223 = vpop.f32.mrf.mxu0
    %v224 = vadd.f32 0.0, %v223
    %v225 = vpop.f32.mrf.mxu0
    %226 = vmatprep.mubr.f32.mxu0 0.0
    %227 = vmatmul.mubr.f32.gmra.mxu0 %v85
    %v228 = vpop.f32.mrf.mxu0
    %v229 = vadd.f32 0.0, %v228
    %v230 = vpop.f32.mrf.mxu0
    %231 = vdwg.mxu0
    %v232 = vld [vmem:[%s2] sm:$0x1]
    %v234 = vlaneseq
    %v235 = vshrl.u32 %v234, 7
    %v236 = vsub.s32 0, %v235
    %v237 = vrot.slane %v232, %v236
    %v239 = vmul.f32 %v154, %v237
    %v240 = vmul.f32 %v159, %v237
    %v241 = vmul.f32 %v164, %v237
    %v242 = vmul.f32 %v169, %v237
    %v243 = vmul.f32 %v174, %v237
    %v244 = vmul.f32 %v179, %v237
    %v245 = vmul.f32 %v184, %v237
    %v246 = vmul.f32 %v189, %v237
    %v247 = vmul.f32 %v194, %v237
    %v248 = vmul.f32 %v199, %v237
    %v249 = vmul.f32 %v204, %v237
    %v250 = vmul.f32 %v209, %v237
    %v251 = vmul.f32 %v214, %v237
    %v252 = vmul.f32 %v219, %v237
    %v253 = vmul.f32 %v224, %v237
    %v254 = vmul.f32 %v229, %v237
    %v256 = vsel %vm38, %v154, 0
    %v259 = vsel %vm38, %v159, 0
    %v262 = vsel %vm38, %v164, 0
    %v265 = vsel %vm38, %v169, 0
    %v268 = vsel %vm38, %v239, 0
    %v271 = vsel %vm38, %v240, 0
    %v274 = vsel %vm38, %v241, 0
    %v277 = vsel %vm38, %v242, 0
    %279 = vmatprep.subr.mxu0 0.0
    %280 = vmatpush1.xpose.msra.mxu0 0.0
    %281 = vmatprep.subr.mxu0 0.0
    %282 = vmatpush1.xpose.msra.mxu0 0.0
    %283 = vmatprep.subr.mxu0 0.0
    %284 = vmatpush1.xpose.msra.mxu0 0.0
    %285 = vmatprep.subr.mxu0 0.0
    %286 = vmatpush1.xpose.msra.mxu0 0.0
    %287 = vmatprep.subr.mxu0 0.0
    %288 = vmatpush1.xpose.msra.mxu0 0.0
    %289 = vmatprep.subr.mxu0 0.0
    %290 = vmatpush1.xpose.msra.mxu0 0.0
    %291 = vmatprep.subr.mxu0 0.0
    %292 = vmatpush1.xpose.msra.mxu0 0.0
    %293 = vmatprep.subr.mxu0 0.0
    %294 = vmatpush1.xpose.msra.mxu0 0.0
    %295 = vmatprep.subr.mxu0 0.0
    %296 = vmatpush1.xpose.msra.mxu0 0.0
    %297 = vmatprep.subr.mxu0 0.0
    %298 = vmatpush1.xpose.msra.mxu0 0.0
    %299 = vmatprep.subr.mxu0 0.0
    %300 = vmatpush1.xpose.msra.mxu0 0.0
    %301 = vmatprep.subr.mxu0 0.0
    %302 = vmatpush1.xpose.msra.mxu0 0.0
    %303 = vmatprep.subr.mxu0 0.0
    %304 = vmatpush1.xpose.msra.mxu0 %v277
    %305 = vmatprep.subr.mxu0 0.0
    %306 = vmatpush1.xpose.msra.mxu0 %v274
    %307 = vmatprep.subr.mxu0 0.0
    %308 = vmatpush1.xpose.msra.mxu0 %v271
    %309 = vmatprep.subr.mxu0 0.0
    %310 = vmatpush1.xpose.msra.mxu0 %v268
    %311 = vmatprep.subr.mxu0 0.0
    %312 = vmatpush2.xpose.msra.mxu0 0.0
    %313 = vmatprep.subr.mxu0 0.0
    %314 = vmatpush2.xpose.msra.mxu0 0.0
    %315 = vmatprep.subr.mxu0 0.0
    %316 = vmatpush2.xpose.msra.mxu0 0.0
    %317 = vmatprep.subr.mxu0 0.0
    %318 = vmatpush2.xpose.msra.mxu0 0.0
    %319 = vmatprep.subr.mxu0 0.0
    %320 = vmatpush2.xpose.msra.mxu0 0.0
    %321 = vmatprep.subr.mxu0 0.0
    %322 = vmatpush2.xpose.msra.mxu0 0.0
    %323 = vmatprep.subr.mxu0 0.0
    %324 = vmatpush2.xpose.msra.mxu0 0.0
    %325 = vmatprep.subr.mxu0 0.0
    %326 = vmatpush2.xpose.msra.mxu0 0.0
    %327 = vmatprep.subr.mxu0 0.0
    %328 = vmatpush2.xpose.msra.mxu0 0.0
    %329 = vmatprep.subr.mxu0 0.0
    %330 = vmatpush2.xpose.msra.mxu0 0.0
    %331 = vmatprep.subr.mxu0 0.0
    %332 = vmatpush2.xpose.msra.mxu0 0.0
    %333 = vmatprep.subr.mxu0 0.0
    %334 = vmatpush2.xpose.msra.mxu0 0.0
    %335 = vmatprep.subr.mxu0 0.0
    %336 = vmatpush2.xpose.msra.mxu0 0.0
    %337 = vmatprep.subr.mxu0 0.0
    %338 = vmatpush2.xpose.msra.mxu0 0.0
    %339 = vmatprep.subr.mxu0 0.0
    %340 = vmatpush2.xpose.msra.mxu0 0.0
    %341 = vmatprep.subr.mxu0 0.0
    %342 = vmatpush2.xpose.msra.mxu0 0.0
    %343 = vmatprep.mubr.f32.mxu0 0.0
    %344 = vmatmul.mubr.f32.gmra.mxu0 %v256
    %v345 = vpop.f32.mrf.mxu0
    %v346 = vadd.f32 0.0, %v345
    %v347 = vpop.f32.mrf.mxu0
    %348 = vmatprep.mubr.f32.mxu0 0.0
    %349 = vmatmul.mubr.f32.gmra.mxu0 %v259
    %v350 = vpop.f32.mrf.mxu0
    %v351 = vadd.f32 0.0, %v350
    %v352 = vpop.f32.mrf.mxu0
    %353 = vmatprep.mubr.f32.mxu0 0.0
    %354 = vmatmul.mubr.f32.gmra.mxu0 %v262
    %v355 = vpop.f32.mrf.mxu0
    %v356 = vadd.f32 0.0, %v355
    %v357 = vpop.f32.mrf.mxu0
    %358 = vmatprep.mubr.f32.mxu0 0.0
    %359 = vmatmul.mubr.f32.gmra.mxu0 %v265
    %v360 = vpop.f32.mrf.mxu0
    %v361 = vadd.f32 0.0, %v360
    %v362 = vpop.f32.mrf.mxu0
    %363 = vdwg.mxu0
    %v365 = vsel %vm38, %v174, 0
    %v368 = vsel %vm38, %v179, 0
    %v371 = vsel %vm38, %v184, 0
    %v374 = vsel %vm38, %v189, 0
    %v377 = vsel %vm38, %v243, 0
    %v380 = vsel %vm38, %v244, 0
    %v383 = vsel %vm38, %v245, 0
    %v386 = vsel %vm38, %v246, 0
    %388 = vmatprep.subr.mxu0 0.0
    %389 = vmatpush1.xpose.msra.mxu0 0.0
    %390 = vmatprep.subr.mxu0 0.0
    %391 = vmatpush1.xpose.msra.mxu0 0.0
    %392 = vmatprep.subr.mxu0 0.0
    %393 = vmatpush1.xpose.msra.mxu0 0.0
    %394 = vmatprep.subr.mxu0 0.0
    %395 = vmatpush1.xpose.msra.mxu0 0.0
    %396 = vmatprep.subr.mxu0 0.0
    %397 = vmatpush1.xpose.msra.mxu0 0.0
    %398 = vmatprep.subr.mxu0 0.0
    %399 = vmatpush1.xpose.msra.mxu0 0.0
    %400 = vmatprep.subr.mxu0 0.0
    %401 = vmatpush1.xpose.msra.mxu0 0.0
    %402 = vmatprep.subr.mxu0 0.0
    %403 = vmatpush1.xpose.msra.mxu0 0.0
    %404 = vmatprep.subr.mxu0 0.0
    %405 = vmatpush1.xpose.msra.mxu0 0.0
    %406 = vmatprep.subr.mxu0 0.0
    %407 = vmatpush1.xpose.msra.mxu0 0.0
    %408 = vmatprep.subr.mxu0 0.0
    %409 = vmatpush1.xpose.msra.mxu0 0.0
    %410 = vmatprep.subr.mxu0 0.0
    %411 = vmatpush1.xpose.msra.mxu0 0.0
    %412 = vmatprep.subr.mxu0 0.0
    %413 = vmatpush1.xpose.msra.mxu0 %v386
    %414 = vmatprep.subr.mxu0 0.0
    %415 = vmatpush1.xpose.msra.mxu0 %v383
    %416 = vmatprep.subr.mxu0 0.0
    %417 = vmatpush1.xpose.msra.mxu0 %v380
    %418 = vmatprep.subr.mxu0 0.0
    %419 = vmatpush1.xpose.msra.mxu0 %v377
    %420 = vmatprep.subr.mxu0 0.0
    %421 = vmatpush2.xpose.msra.mxu0 0.0
    %422 = vmatprep.subr.mxu0 0.0
    %423 = vmatpush2.xpose.msra.mxu0 0.0
    %424 = vmatprep.subr.mxu0 0.0
    %425 = vmatpush2.xpose.msra.mxu0 0.0
    %426 = vmatprep.subr.mxu0 0.0
    %427 = vmatpush2.xpose.msra.mxu0 0.0
    %428 = vmatprep.subr.mxu0 0.0
    %429 = vmatpush2.xpose.msra.mxu0 0.0
    %430 = vmatprep.subr.mxu0 0.0
    %431 = vmatpush2.xpose.msra.mxu0 0.0
    %432 = vmatprep.subr.mxu0 0.0
    %433 = vmatpush2.xpose.msra.mxu0 0.0
    %434 = vmatprep.subr.mxu0 0.0
    %435 = vmatpush2.xpose.msra.mxu0 0.0
    %436 = vmatprep.subr.mxu0 0.0
    %437 = vmatpush2.xpose.msra.mxu0 0.0
    %438 = vmatprep.subr.mxu0 0.0
    %439 = vmatpush2.xpose.msra.mxu0 0.0
    %440 = vmatprep.subr.mxu0 0.0
    %441 = vmatpush2.xpose.msra.mxu0 0.0
    %442 = vmatprep.subr.mxu0 0.0
    %443 = vmatpush2.xpose.msra.mxu0 0.0
    %444 = vmatprep.subr.mxu0 0.0
    %445 = vmatpush2.xpose.msra.mxu0 0.0
    %446 = vmatprep.subr.mxu0 0.0
    %447 = vmatpush2.xpose.msra.mxu0 0.0
    %448 = vmatprep.subr.mxu0 0.0
    %449 = vmatpush2.xpose.msra.mxu0 0.0
    %450 = vmatprep.subr.mxu0 0.0
    %451 = vmatpush2.xpose.msra.mxu0 0.0
    %452 = vmatprep.mubr.f32.mxu0 0.0
    %453 = vmatmul.mubr.f32.gmra.mxu0 %v365
    %v454 = vpop.f32.mrf.mxu0
    %v455 = vadd.f32 0.0, %v454
    %v456 = vpop.f32.mrf.mxu0
    %457 = vmatprep.mubr.f32.mxu0 0.0
    %458 = vmatmul.mubr.f32.gmra.mxu0 %v368
    %v459 = vpop.f32.mrf.mxu0
    %v460 = vadd.f32 0.0, %v459
    %v461 = vpop.f32.mrf.mxu0
    %462 = vmatprep.mubr.f32.mxu0 0.0
    %463 = vmatmul.mubr.f32.gmra.mxu0 %v371
    %v464 = vpop.f32.mrf.mxu0
    %v465 = vadd.f32 0.0, %v464
    %v466 = vpop.f32.mrf.mxu0
    %467 = vmatprep.mubr.f32.mxu0 0.0
    %468 = vmatmul.mubr.f32.gmra.mxu0 %v374
    %v469 = vpop.f32.mrf.mxu0
    %v470 = vadd.f32 0.0, %v469
    %v471 = vpop.f32.mrf.mxu0
    %472 = vdwg.mxu0
    %v474 = vsel %vm38, %v194, 0
    %v477 = vsel %vm38, %v199, 0
    %v480 = vsel %vm38, %v204, 0
    %v483 = vsel %vm38, %v209, 0
    %v486 = vsel %vm38, %v247, 0
    %v489 = vsel %vm38, %v248, 0
    %v492 = vsel %vm38, %v249, 0
    %v495 = vsel %vm38, %v250, 0
    %497 = vmatprep.subr.mxu0 0.0
    %498 = vmatpush1.xpose.msra.mxu0 0.0
    %499 = vmatprep.subr.mxu0 0.0
    %500 = vmatpush1.xpose.msra.mxu0 0.0
    %501 = vmatprep.subr.mxu0 0.0
    %502 = vmatpush1.xpose.msra.mxu0 0.0
    %503 = vmatprep.subr.mxu0 0.0
    %504 = vmatpush1.xpose.msra.mxu0 0.0
    %505 = vmatprep.subr.mxu0 0.0
    %506 = vmatpush1.xpose.msra.mxu0 0.0
    %507 = vmatprep.subr.mxu0 0.0
    %508 = vmatpush1.xpose.msra.mxu0 0.0
    %509 = vmatprep.subr.mxu0 0.0
    %510 = vmatpush1.xpose.msra.mxu0 0.0
    %511 = vmatprep.subr.mxu0 0.0
    %512 = vmatpush1.xpose.msra.mxu0 0.0
    %513 = vmatprep.subr.mxu0 0.0
    %514 = vmatpush1.xpose.msra.mxu0 0.0
    %515 = vmatprep.subr.mxu0 0.0
    %516 = vmatpush1.xpose.msra.mxu0 0.0
    %517 = vmatprep.subr.mxu0 0.0
    %518 = vmatpush1.xpose.msra.mxu0 0.0
    %519 = vmatprep.subr.mxu0 0.0
    %520 = vmatpush1.xpose.msra.mxu0 0.0
    %521 = vmatprep.subr.mxu0 0.0
    %522 = vmatpush1.xpose.msra.mxu0 %v495
    %523 = vmatprep.subr.mxu0 0.0
    %524 = vmatpush1.xpose.msra.mxu0 %v492
    %525 = vmatprep.subr.mxu0 0.0
    %526 = vmatpush1.xpose.msra.mxu0 %v489
    %527 = vmatprep.subr.mxu0 0.0
    %528 = vmatpush1.xpose.msra.mxu0 %v486
    %529 = vmatprep.subr.mxu0 0.0
    %530 = vmatpush2.xpose.msra.mxu0 0.0
    %531 = vmatprep.subr.mxu0 0.0
    %532 = vmatpush2.xpose.msra.mxu0 0.0
    %533 = vmatprep.subr.mxu0 0.0
    %534 = vmatpush2.xpose.msra.mxu0 0.0
    %535 = vmatprep.subr.mxu0 0.0
    %536 = vmatpush2.xpose.msra.mxu0 0.0
    %537 = vmatprep.subr.mxu0 0.0
    %538 = vmatpush2.xpose.msra.mxu0 0.0
    %539 = vmatprep.subr.mxu0 0.0
    %540 = vmatpush2.xpose.msra.mxu0 0.0
    %541 = vmatprep.subr.mxu0 0.0
    %542 = vmatpush2.xpose.msra.mxu0 0.0
    %543 = vmatprep.subr.mxu0 0.0
    %544 = vmatpush2.xpose.msra.mxu0 0.0
    %545 = vmatprep.subr.mxu0 0.0
    %546 = vmatpush2.xpose.msra.mxu0 0.0
    %547 = vmatprep.subr.mxu0 0.0
    %548 = vmatpush2.xpose.msra.mxu0 0.0
    %549 = vmatprep.subr.mxu0 0.0
    %550 = vmatpush2.xpose.msra.mxu0 0.0
    %551 = vmatprep.subr.mxu0 0.0
    %552 = vmatpush2.xpose.msra.mxu0 0.0
    %553 = vmatprep.subr.mxu0 0.0
    %554 = vmatpush2.xpose.msra.mxu0 0.0
    %555 = vmatprep.subr.mxu0 0.0
    %556 = vmatpush2.xpose.msra.mxu0 0.0
    %557 = vmatprep.subr.mxu0 0.0
    %558 = vmatpush2.xpose.msra.mxu0 0.0
    %559 = vmatprep.subr.mxu0 0.0
    %560 = vmatpush2.xpose.msra.mxu0 0.0
    %561 = vmatprep.mubr.f32.mxu0 0.0
    %562 = vmatmul.mubr.f32.gmra.mxu0 %v474
    %v563 = vpop.f32.mrf.mxu0
    %v564 = vadd.f32 0.0, %v563
    %v565 = vpop.f32.mrf.mxu0
    %566 = vmatprep.mubr.f32.mxu0 0.0
    %567 = vmatmul.mubr.f32.gmra.mxu0 %v477
    %v568 = vpop.f32.mrf.mxu0
    %v569 = vadd.f32 0.0, %v568
    %v570 = vpop.f32.mrf.mxu0
    %571 = vmatprep.mubr.f32.mxu0 0.0
    %572 = vmatmul.mubr.f32.gmra.mxu0 %v480
    %v573 = vpop.f32.mrf.mxu0
    %v574 = vadd.f32 0.0, %v573
    %v575 = vpop.f32.mrf.mxu0
    %576 = vmatprep.mubr.f32.mxu0 0.0
    %577 = vmatmul.mubr.f32.gmra.mxu0 %v483
    %v578 = vpop.f32.mrf.mxu0
    %v579 = vadd.f32 0.0, %v578
    %v580 = vpop.f32.mrf.mxu0
    %581 = vdwg.mxu0
    %v583 = vsel %vm38, %v214, 0
    %v586 = vsel %vm38, %v219, 0
    %v589 = vsel %vm38, %v224, 0
    %v592 = vsel %vm38, %v229, 0
    %v595 = vsel %vm38, %v251, 0
    %v598 = vsel %vm38, %v252, 0
    %v601 = vsel %vm38, %v253, 0
    %v604 = vsel %vm38, %v254, 0
    %606 = vmatprep.subr.mxu0 0.0
    %607 = vmatpush1.xpose.msra.mxu0 0.0
    %608 = vmatprep.subr.mxu0 0.0
    %609 = vmatpush1.xpose.msra.mxu0 0.0
    %610 = vmatprep.subr.mxu0 0.0
    %611 = vmatpush1.xpose.msra.mxu0 0.0
    %612 = vmatprep.subr.mxu0 0.0
    %613 = vmatpush1.xpose.msra.mxu0 0.0
    %614 = vmatprep.subr.mxu0 0.0
    %615 = vmatpush1.xpose.msra.mxu0 0.0
    %616 = vmatprep.subr.mxu0 0.0
    %617 = vmatpush1.xpose.msra.mxu0 0.0
    %618 = vmatprep.subr.mxu0 0.0
    %619 = vmatpush1.xpose.msra.mxu0 0.0
    %620 = vmatprep.subr.mxu0 0.0
    %621 = vmatpush1.xpose.msra.mxu0 0.0
    %622 = vmatprep.subr.mxu0 0.0
    %623 = vmatpush1.xpose.msra.mxu0 0.0
    %624 = vmatprep.subr.mxu0 0.0
    %625 = vmatpush1.xpose.msra.mxu0 0.0
    %626 = vmatprep.subr.mxu0 0.0
    %627 = vmatpush1.xpose.msra.mxu0 0.0
    %628 = vmatprep.subr.mxu0 0.0
    %629 = vmatpush1.xpose.msra.mxu0 0.0
    %630 = vmatprep.subr.mxu0 0.0
    %631 = vmatpush1.xpose.msra.mxu0 %v604
    %632 = vmatprep.subr.mxu0 0.0
    %633 = vmatpush1.xpose.msra.mxu0 %v601
    %634 = vmatprep.subr.mxu0 0.0
    %635 = vmatpush1.xpose.msra.mxu0 %v598
    %636 = vmatprep.subr.mxu0 0.0
    %637 = vmatpush1.xpose.msra.mxu0 %v595
    %638 = vmatprep.subr.mxu0 0.0
    %639 = vmatpush2.xpose.msra.mxu0 0.0
    %640 = vmatprep.subr.mxu0 0.0
    %641 = vmatpush2.xpose.msra.mxu0 0.0
    %642 = vmatprep.subr.mxu0 0.0
    %643 = vmatpush2.xpose.msra.mxu0 0.0
    %644 = vmatprep.subr.mxu0 0.0
    %645 = vmatpush2.xpose.msra.mxu0 0.0
    %646 = vmatprep.subr.mxu0 0.0
    %647 = vmatpush2.xpose.msra.mxu0 0.0
    %648 = vmatprep.subr.mxu0 0.0
    %649 = vmatpush2.xpose.msra.mxu0 0.0
    %650 = vmatprep.subr.mxu0 0.0
    %651 = vmatpush2.xpose.msra.mxu0 0.0
    %652 = vmatprep.subr.mxu0 0.0
    %653 = vmatpush2.xpose.msra.mxu0 0.0
    %654 = vmatprep.subr.mxu0 0.0
    %655 = vmatpush2.xpose.msra.mxu0 0.0
    %656 = vmatprep.subr.mxu0 0.0
    %657 = vmatpush2.xpose.msra.mxu0 0.0
    %658 = vmatprep.subr.mxu0 0.0
    %659 = vmatpush2.xpose.msra.mxu0 0.0
    %660 = vmatprep.subr.mxu0 0.0
    %661 = vmatpush2.xpose.msra.mxu0 0.0
    %662 = vmatprep.subr.mxu0 0.0
    %663 = vmatpush2.xpose.msra.mxu0 0.0
    %664 = vmatprep.subr.mxu0 0.0
    %665 = vmatpush2.xpose.msra.mxu0 0.0
    %666 = vmatprep.subr.mxu0 0.0
    %667 = vmatpush2.xpose.msra.mxu0 0.0
    %668 = vmatprep.subr.mxu0 0.0
    %669 = vmatpush2.xpose.msra.mxu0 0.0
    %670 = vmatprep.mubr.f32.mxu0 0.0
    %671 = vmatmul.mubr.f32.gmra.mxu0 %v583
    %v672 = vpop.f32.mrf.mxu0
    %v673 = vadd.f32 0.0, %v672
    %v674 = vpop.f32.mrf.mxu0
    %675 = vmatprep.mubr.f32.mxu0 0.0
    %676 = vmatmul.mubr.f32.gmra.mxu0 %v586
    %v677 = vpop.f32.mrf.mxu0
    %v678 = vadd.f32 0.0, %v677
    %v679 = vpop.f32.mrf.mxu0
    %680 = vmatprep.mubr.f32.mxu0 0.0
    %681 = vmatmul.mubr.f32.gmra.mxu0 %v589
    %v682 = vpop.f32.mrf.mxu0
    %v683 = vadd.f32 0.0, %v682
    %v684 = vpop.f32.mrf.mxu0
    %685 = vmatprep.mubr.f32.mxu0 0.0
    %686 = vmatmul.mubr.f32.gmra.mxu0 %v592
    %v687 = vpop.f32.mrf.mxu0
    %v688 = vadd.f32 0.0, %v687
    %v689 = vpop.f32.mrf.mxu0
    %690 = vdwg.mxu0
    %v691 = vld [vmem:[%s3] sm:$0xff]
    %v692 = vld [vmem:[%s3 + $0x8] sm:$0xff]
    %v693 = vld [vmem:[%s3 + $0x10] sm:$0xff]
    %v694 = vld [vmem:[%s3 + $0x18] sm:$0xff]
    %v695 = vmul.f32 %v346, %v691
    %v696 = vmul.f32 %v351, %v692
    %v697 = vmul.f32 %v356, %v693
    %v698 = vmul.f32 %v361, %v694
    %v699 = vmul.f32 %v455, %v691
    %v700 = vmul.f32 %v460, %v692
    %v701 = vmul.f32 %v465, %v693
    %v702 = vmul.f32 %v470, %v694
    %v703 = vmul.f32 %v564, %v691
    %v704 = vmul.f32 %v569, %v692
    %v705 = vmul.f32 %v574, %v693
    %v706 = vmul.f32 %v579, %v694
    %v707 = vmul.f32 %v673, %v691
    %v708 = vmul.f32 %v678, %v692
    %v709 = vmul.f32 %v683, %v693
    %v710 = vmul.f32 %v688, %v694
    %v711 = vsel %vm38, %v695, 0.0
    %v712 = vsel %vm38, %v696, 0.0
    %v713 = vadd.f32 %v711, %v712
    %v714 = vsel %vm38, %v697, 0.0
    %v715 = vadd.f32 %v713, %v714
    %v716 = vsel %vm38, %v698, 0.0
    %v717 = vadd.f32 %v715, %v716
    %v718 = vrot.slane %v717, 4
    %v719 = vadd.f32 %v717, %v718
    %v720 = vrot.slane %v719, 2
    %v721 = vadd.f32 %v719, %v720
    %v722 = vrot.slane %v721, 1
    %v723 = vadd.f32 %v721, %v722
    %v724 = vsel %vm38, %v699, 0.0
    %v725 = vsel %vm38, %v700, 0.0
    %v726 = vadd.f32 %v724, %v725
    %v727 = vsel %vm38, %v701, 0.0
    %v728 = vadd.f32 %v726, %v727
    %v729 = vsel %vm38, %v702, 0.0
    %v730 = vadd.f32 %v728, %v729
    %v731 = vrot.slane %v730, 4
    %v732 = vadd.f32 %v730, %v731
    %v733 = vrot.slane %v732, 2
    %v734 = vadd.f32 %v732, %v733
    %v735 = vrot.slane %v734, 1
    %v736 = vadd.f32 %v734, %v735
    %v737 = vsel %vm38, %v703, 0.0
    %v738 = vsel %vm38, %v704, 0.0
    %v739 = vadd.f32 %v737, %v738
    %v740 = vsel %vm38, %v705, 0.0
    %v741 = vadd.f32 %v739, %v740
    %v742 = vsel %vm38, %v706, 0.0
    %v743 = vadd.f32 %v741, %v742
    %v744 = vrot.slane %v743, 4
    %v745 = vadd.f32 %v743, %v744
    %v746 = vrot.slane %v745, 2
    %v747 = vadd.f32 %v745, %v746
    %v748 = vrot.slane %v747, 1
    %v749 = vadd.f32 %v747, %v748
    %v750 = vsel %vm38, %v707, 0.0
    %v751 = vsel %vm38, %v708, 0.0
    %v752 = vadd.f32 %v750, %v751
    %v753 = vsel %vm38, %v709, 0.0
    %v754 = vadd.f32 %v752, %v753
    %v755 = vsel %vm38, %v710, 0.0
    %v756 = vadd.f32 %v754, %v755
    %v757 = vrot.slane %v756, 4
    %v758 = vadd.f32 %v756, %v757
    %v759 = vrot.slane %v758, 2
    %v760 = vadd.f32 %v758, %v759
    %v761 = vrot.slane %v760, 1
    %v762 = vadd.f32 %v760, %v761
    %vm767 = vcmask 1041409
    %v768 = vsel %vm767, %v736, %v723
    %vm769 = vcmask 1042434
    %v770 = vsel %vm769, %v749, %v768
    %vm771 = vcmask 1043459
    %v772 = vsel %vm771, %v762, %v770
    %vm774 = vcmask 257024
    %775 = vst.msk [vmem:[#allocation2] sm:$0xf] %vm774, %v772
    // Predicated region
    $region18: #{tpu_custom_call.1} parent=1 // pred_check
      _
    $region19: #{tpu_custom_call.1} parent=1 // pred_check_branch
      %777 = sbr.rel (0) target = $region21
    $region20: #{tpu_custom_call.1} parent=1 // pred_region
      %s779 = ssub.s32 64, 64
      %780 = vsyncadd [#allocation3], %s779
      %s782 = sshll.u32 [#allocation2], 4
      %s783 = int_to_ptr.vmem [resolvable:$true] %s782
      %785 = dma.vmem_to_hbm [thread:$0]  %s783, 64, %s4, [#allocation3]
    $region21: #{tpu_custom_call.1} parent=1 // pred_fallthru
      _
    // Predicated region
    $region22: #{tpu_custom_call.1} parent=1 // pred_check
      _
    $region23: #{tpu_custom_call.1} parent=1 // pred_check_branch
      %787 = sbr.rel (0) target = $region25
    $region24: #{tpu_custom_call.1} parent=1 // pred_region
      %788 = dma.done [#allocation3], 64
    $region25: #{tpu_custom_call.1} parent=1 // pred_fallthru
      _
    %789 = vsyncpa [#allocation3], 1

</llo_original>
